<compile_context>
chip_gen: v7x
topology: tpu7x:2x2x1
jax: 0.10.0
libtpu: 0.0.40
codegen_flags: <defaults>
</compile_context>

<pallas_src>
import jax
import jax.numpy as jnp
import numpy as np
from jax.experimental import pallas as pl
from jax.experimental.pallas import tpu as pltpu

# ---------------- configuration (small, consistent with the module) ----------------
B, CIN, H, W = 2, 4, 16, 16
COUT = 8
K = 3                    # kernel_size
STRIDE = 3               # module default
PADDING = 0
DILATION = 1
GROUPS = 1
KN = 4                   # kernel_num (asserted == 4 in the module)
TEMP = 34.0              # temperature
REDUCTION = 0.0625
ATT = max(int(CIN * REDUCTION), 16)   # attention_channel (min_channel=16)
KK = K * K
CKK = CIN * KK
HO = (H + 2 * PADDING - DILATION * (K - 1) - 1) // STRIDE + 1
WO = (W + 2 * PADDING - DILATION * (K - 1) - 1) // STRIDE + 1
P = HO * WO
KNCOUT = KN * COUT       # 32
OUT_PAD = 128            # lane-dense output store; sliced back to COUT in wrapper
NLOG = CIN + COUT + KK + KN   # 25 fused gate logits

assert GROUPS == 1 and DILATION == 1, "this synthetic kernel covers groups=1, dilation=1"


def _ru8(n):
    return ((n + 7) // 8) * 8


# packed attention-FC parameter block (sublane-aligned sub-blocks)
AP_FC_R0 = 0                       # fc weight (CIN, ATT)
AP_W_R0 = _ru8(AP_FC_R0 + CIN)     # fused gate weight (ATT, NLOG), 1/TEMP folded
AP_B_R0 = AP_W_R0 + ATT            # fused gate bias (1, NLOG), 1/TEMP folded
AP_ROWS = AP_B_R0 + 1
AP_COLS = max(ATT, NLOG)

# packed 0/1 expansion-constant block (sublane-aligned sub-blocks)
EC_R0 = 0                          # channel attention -> CKK axis   (CIN, CKK)
ES_R0 = EC_R0 + _ru8(CIN)          # spatial attention -> CKK axis   (KK, CKK)
EK_R0 = ES_R0 + _ru8(KK)           # kernel attention -> KNCOUT axis (KN, KNCOUT)
EF_R0 = EK_R0 + _ru8(KN)           # filter attention -> KNCOUT axis (COUT, KNCOUT)
S_R0 = EF_R0 + _ru8(COUT)          # sum over KN, lane-padded        (KNCOUT, OUT_PAD)
CONST_ROWS = S_R0 + _ru8(KNCOUT)
CONST_COLS = OUT_PAD


def _build_consts():
    c = np.zeros((CONST_ROWS, CONST_COLS), np.float32)
    for ch in range(CIN):
        for s in range(KK):
            c[EC_R0 + ch, ch * KK + s] = 1.0
            c[ES_R0 + s, ch * KK + s] = 1.0
    for n in range(KN):
        for o in range(COUT):
            c[EK_R0 + n, n * COUT + o] = 1.0
            c[EF_R0 + o, n * COUT + o] = 1.0
            c[S_R0 + n * COUT + o, o] = 1.0
    return c


CONSTS_NP = _build_consts()


# ---------------- fused Pallas kernel: attention head + dynamic conv ----------------
# NOTE: the PyTorch Attention.forward never applies self.bn, so BN is omitted here too.
def odconv_fused_kernel(pooled_ref, ap_ref, const_ref, xp_ref, w_ref, out_ref):
    f32 = jnp.float32

    # ---- attention head: fc + relu, then ONE fused FC for all four gates ----
    pooled = pooled_ref[0]                                                    # (1, CIN)
    fc_w = ap_ref[AP_FC_R0:AP_FC_R0 + CIN, 0:ATT]                             # (CIN, ATT)
    h = jnp.maximum(jnp.dot(pooled, fc_w, preferred_element_type=f32), 0.0)   # (1, ATT)

    cat_w = ap_ref[AP_W_R0:AP_W_R0 + ATT, 0:NLOG]                             # (ATT, NLOG)
    cat_b = ap_ref[AP_B_R0:AP_B_R0 + 1, 0:NLOG]                               # (1, NLOG)
    logits = jnp.dot(h, cat_w, preferred_element_type=f32) + cat_b            # (1, NLOG)

    ca = jax.nn.sigmoid(logits[:, 0:CIN])                                     # (1, CIN)
    fa = jax.nn.sigmoid(logits[:, CIN:CIN + COUT])                            # (1, COUT)
    sa = jax.nn.sigmoid(logits[:, CIN + COUT:CIN + COUT + KK])                # (1, KK)
    kl = logits[:, CIN + COUT + KK:NLOG]                                      # (1, KN)
    ke = jnp.exp(kl)                                                          # logits tiny (/TEMP folded)
    ka = ke * pl.reciprocal(jnp.sum(ke, axis=-1, keepdims=True), approx=True) # softmax, EUP recip

    # ---- expand per-sample attentions via constant 0/1 matrices (tiny MXU matmuls) ----
    e_c = const_ref[EC_R0:EC_R0 + CIN, 0:CKK]
    e_s = const_ref[ES_R0:ES_R0 + KK, 0:CKK]
    e_k = const_ref[EK_R0:EK_R0 + KN, 0:KNCOUT]
    e_f = const_ref[EF_R0:EF_R0 + COUT, 0:KNCOUT]
    s_m = const_ref[S_R0:S_R0 + KNCOUT, 0:OUT_PAD]

    in_scale = (jnp.dot(ca, e_c, preferred_element_type=f32)
                * jnp.dot(sa, e_s, preferred_element_type=f32))               # (1, CKK)
    out_scale = (jnp.dot(ka, e_k, preferred_element_type=f32)
                 * jnp.dot(fa, e_f, preferred_element_type=f32))              # (1, KNCOUT)

    # ---- dynamic conv: f32 VPU scale, bf16 MXU matmul against the static bank ----
    xs = (xp_ref[0].astype(f32) * in_scale).astype(jnp.bfloat16)              # (P, CKK)
    y = jnp.dot(xs, w_ref[...], preferred_element_type=f32)                   # (P, KNCOUT) f32 acc
    # scale by kernel+filter attention, sum over KN with the 0/1 selection matrix;
    # 128-wide columns -> lane-dense (unmasked) output store.
    out_ref[0] = jnp.dot(y * out_scale, s_m,
                         preferred_element_type=f32).astype(out_ref.dtype)    # (P, OUT_PAD)


# ---------------- JAX glue ----------------
def odconv2d_forward(x, params):
    fcw, cw, cb, fw, fb, sw, sb, kw, kb, weight = params

    # global average pool in the wrapper (32-byte result, trivially fused by XLA)
    pooled = jnp.mean(x, axis=(2, 3)).reshape(B, 1, CIN).astype(jnp.float32)

    # pack fc + the four gate FCs into one parameter block, folding 1/TEMP
    inv_t = jnp.float32(1.0 / TEMP)
    cat_w = jnp.concatenate([cw.T, fw.T, sw.T, kw.T], axis=1) * inv_t         # (ATT, NLOG)
    cat_b = jnp.concatenate([cb, fb, sb, kb]) * inv_t                         # (NLOG,)
    ap = jnp.zeros((AP_ROWS, AP_COLS), jnp.float32)
    ap = ap.at[AP_FC_R0:AP_FC_R0 + CIN, 0:ATT].set(fcw.T)
    ap = ap.at[AP_W_R0:AP_W_R0 + ATT, 0:NLOG].set(cat_w)
    ap = ap.at[AP_B_R0, 0:NLOG].set(cat_b)

    # im2col as one fused XLA gather-conv; feature axis order c*KK + ky*K + kx
    patches = jax.lax.conv_general_dilated_patches(
        x, (K, K), (STRIDE, STRIDE), padding=[(PADDING, PADDING)] * 2,
        dimension_numbers=('NCHW', 'OIHW', 'NHWC'))                           # (B, HO, WO, CKK)
    patches = patches.reshape(B, P, CKK).astype(jnp.bfloat16)                 # no pad, bf16 MXU operand

    # static KN-stacked bank, pre-transposed to MXU-native (K, N), bf16
    w_bank = weight.reshape(KNCOUT, CKK).T.astype(jnp.bfloat16)               # (CKK, KNCOUT)

    out_pad = pl.pallas_call(
        odconv_fused_kernel,
        out_shape=jax.ShapeDtypeStruct((B, P, OUT_PAD), jnp.float32),
        grid=(B,),
        in_specs=[
            pl.BlockSpec((1, 1, CIN), lambda b: (b, 0, 0)),                   # pooled
            pl.BlockSpec((AP_ROWS, AP_COLS), lambda b: (0, 0)),               # packed FC params
            pl.BlockSpec((CONST_ROWS, CONST_COLS), lambda b: (0, 0)),         # packed 0/1 consts
            pl.BlockSpec((1, P, CKK), lambda b: (b, 0, 0)),                   # patches
            pl.BlockSpec((CKK, KNCOUT), lambda b: (0, 0)),                    # weight bank
        ],
        out_specs=pl.BlockSpec((1, P, OUT_PAD), lambda b: (b, 0, 0)),
        compiler_params=pltpu.CompilerParams(dimension_semantics=("parallel",)),
    )(pooled, ap, jnp.asarray(CONSTS_NP), patches, w_bank)

    out = out_pad[:, :, :COUT].reshape(B, HO, WO, COUT)                       # drop lane padding
    return jnp.transpose(out, (0, 3, 1, 2))                                   # (B, COUT, HO, WO)


# ---------------- pure-JAX reference (for verification) ----------------
def reference_forward(x, params):
    fcw, cw, cb, fw, fb, sw, sb, kw, kb, weight = params
    pooled = jnp.mean(x, axis=(2, 3))
    h = jax.nn.relu(pooled @ fcw.T)
    ca = jax.nn.sigmoid((h @ cw.T + cb) / TEMP)
    fa = jax.nn.sigmoid((h @ fw.T + fb) / TEMP)
    sa = jax.nn.sigmoid((h @ sw.T + sb) / TEMP)
    ka = jax.nn.softmax((h @ kw.T + kb) / TEMP, axis=1)

    xs = x * ca[:, :, None, None]
    agg = (sa.reshape(B, 1, 1, 1, K, K) * ka.reshape(B, KN, 1, 1, 1, 1)
           * weight[None]).sum(axis=1)                                        # (B, COUT, CIN, K, K)
    agg = agg.reshape(B * COUT, CIN, K, K)
    xr = xs.reshape(1, B * CIN, H, W)
    out = jax.lax.conv_general_dilated(
        xr, agg, window_strides=(STRIDE, STRIDE),
        padding=[(PADDING, PADDING)] * 2, rhs_dilation=(DILATION, DILATION),
        dimension_numbers=('NCHW', 'OIHW', 'NCHW'),
        feature_group_count=B * GROUPS,
        precision=jax.lax.Precision.HIGHEST)
    return out.reshape(B, COUT, HO, WO) * fa[:, :, None, None]


# ---------------- deterministic parameter init ----------------
def make_params(key):
    ks = jax.random.split(key, 6)

    def kaiming(k, shape, fan_out):
        return (jax.random.normal(k, shape, jnp.float32) * np.sqrt(2.0 / fan_out)).astype(jnp.float32)

    fcw = kaiming(ks[0], (ATT, CIN), ATT)          # fc (1x1 conv, no bias)
    cw = kaiming(ks[1], (CIN, ATT), CIN)           # channel_fc
    cb = jnp.zeros((CIN,), jnp.float32)
    fw = kaiming(ks[2], (COUT, ATT), COUT)         # filter_fc
    fb = jnp.zeros((COUT,), jnp.float32)
    sw = kaiming(ks[3], (KK, ATT), KK)             # spatial_fc
    sb = jnp.zeros((KK,), jnp.float32)
    kw = kaiming(ks[4], (KN, ATT), KN)             # kernel_fc
    kb = jnp.zeros((KN,), jnp.float32)
    weight = kaiming(ks[5], (KN, COUT, CIN, K, K), COUT * K * K)   # dynamic weight bank
    return (fcw, cw, cb, fw, fb, sw, sb, kw, kb, weight)


if __name__ == "__main__":
    key = jax.random.PRNGKey(0)
    k_x, k_p = jax.random.split(key)
    x = jax.random.normal(k_x, (B, CIN, H, W), jnp.float32)
    params = make_params(k_p)

    out = jax.jit(odconv2d_forward)(x, params)
    out = jax.block_until_ready(out)

    ref = jax.block_until_ready(reference_forward(x, params))
    np.testing.assert_allclose(np.asarray(out), np.asarray(ref), rtol=2e-2, atol=2e-2)

    print("KERNEL_OK")
</pallas_src>

<mosaic_0001>
module attributes {stable_mosaic.version = 11 : i64} {
  func.func @odconv_fused_kernel(%arg0: i32, %arg1: memref<1x1x4xf32, #tpu.memory_space<vmem>>, %arg2: memref<25x25xf32, #tpu.memory_space<vmem>>, %arg3: memref<72x128xf32, #tpu.memory_space<vmem>>, %arg4: memref<1x25x36xbf16, #tpu.memory_space<vmem>>, %arg5: memref<36x32xbf16, #tpu.memory_space<vmem>>, %arg6: memref<1x25x128xf32, #tpu.memory_space<vmem>>) attributes {dimension_semantics = [#tpu.dimension_semantics<parallel>], iteration_bounds = array<i64: 2>, scalar_prefetch = 0 : i64, scratch_operands = 0 : i64, tpu.core_type = #tpu.core_type<tc>, window_params = [{transform_indices = @transform_0, window_bounds = array<i64: 1, 1, 4>}, {pipeline_mode = #tpu.pipeline_mode<synchronous>, transform_indices = @transform_1, window_bounds = array<i64: 25, 25>}, {pipeline_mode = #tpu.pipeline_mode<synchronous>, transform_indices = @transform_2, window_bounds = array<i64: 72, 128>}, {transform_indices = @transform_3, window_bounds = array<i64: 1, 25, 36>}, {pipeline_mode = #tpu.pipeline_mode<synchronous>, transform_indices = @transform_4, window_bounds = array<i64: 36, 32>}, {transform_indices = @transform_5, window_bounds = array<i64: 1, 25, 128>}]} {
    %c0 = arith.constant 0 : index
    %c0_0 = arith.constant 0 : index
    %c0_1 = arith.constant 0 : index
    %0 = vector.load %arg1[%c0, %c0_0, %c0_1] : memref<1x1x4xf32, #tpu.memory_space<vmem>>, vector<1x1x4xf32>
    %1 = vector.shape_cast %0 : vector<1x1x4xf32> to vector<1x4xf32>
    %c0_2 = arith.constant 0 : index
    %c0_3 = arith.constant 0 : index
    %2 = vector.load %arg2[%c0_2, %c0_3] : memref<25x25xf32, #tpu.memory_space<vmem>>, vector<4x16xf32>
    %cst = arith.constant dense<0.000000e+00> : vector<1x16xf32>
    %3 = tpu.matmul %1, %2, %cst {dimension_numbers = #tpu.dot_dimension_numbers<[1], [0], [0], [1], [0, 0, 1, 1], [], []>} : vector<1x4xf32>, vector<4x16xf32>, vector<1x16xf32> -> vector<1x16xf32>
    %cst_4 = arith.constant 0.000000e+00 : f32
    %4 = vector.broadcast %cst_4 : f32 to vector<1x16xf32>
    %5 = arith.maximumf %3, %4 : vector<1x16xf32>
    %c8 = arith.constant 8 : index
    %c0_5 = arith.constant 0 : index
    %6 = vector.load %arg2[%c8, %c0_5] : memref<25x25xf32, #tpu.memory_space<vmem>>, vector<16x25xf32>
    %c24 = arith.constant 24 : index
    %c0_6 = arith.constant 0 : index
    %7 = vector.load %arg2[%c24, %c0_6] : memref<25x25xf32, #tpu.memory_space<vmem>>, vector<1x25xf32>
    %cst_7 = arith.constant dense<0.000000e+00> : vector<1x25xf32>
    %8 = tpu.matmul %5, %6, %cst_7 {dimension_numbers = #tpu.dot_dimension_numbers<[1], [0], [0], [1], [0, 0, 1, 1], [], []>} : vector<1x16xf32>, vector<16x25xf32>, vector<1x25xf32> -> vector<1x25xf32>
    %9 = arith.addf %8, %7 : vector<1x25xf32>
    %10 = vector.extract_strided_slice %9 {offsets = [0, 0], sizes = [1, 4], strides = [1, 1]} : vector<1x25xf32> to vector<1x4xf32>
    %11 = arith.negf %10 : vector<1x4xf32>
    %12 = math.exp %11 : vector<1x4xf32>
    %cst_8 = arith.constant 1.000000e+00 : f32
    %13 = vector.broadcast %cst_8 : f32 to vector<1x4xf32>
    %14 = arith.addf %13, %12 : vector<1x4xf32>
    %15 = arith.divf %13, %14 : vector<1x4xf32>
    %16 = vector.extract_strided_slice %9 {offsets = [0, 4], sizes = [1, 8], strides = [1, 1]} : vector<1x25xf32> to vector<1x8xf32>
    %17 = arith.negf %16 : vector<1x8xf32>
    %18 = math.exp %17 : vector<1x8xf32>
    %cst_9 = arith.constant 1.000000e+00 : f32
    %19 = vector.broadcast %cst_9 : f32 to vector<1x8xf32>
    %20 = arith.addf %19, %18 : vector<1x8xf32>
    %21 = arith.divf %19, %20 : vector<1x8xf32>
    %22 = vector.extract_strided_slice %9 {offsets = [0, 12], sizes = [1, 9], strides = [1, 1]} : vector<1x25xf32> to vector<1x9xf32>
    %23 = arith.negf %22 : vector<1x9xf32>
    %24 = math.exp %23 : vector<1x9xf32>
    %cst_10 = arith.constant 1.000000e+00 : f32
    %25 = vector.broadcast %cst_10 : f32 to vector<1x9xf32>
    %26 = arith.addf %25, %24 : vector<1x9xf32>
    %27 = arith.divf %25, %26 : vector<1x9xf32>
    %28 = vector.extract_strided_slice %9 {offsets = [0, 21], sizes = [1, 4], strides = [1, 1]} : vector<1x25xf32> to vector<1x4xf32>
    %29 = math.exp %28 : vector<1x4xf32>
    %cst_11 = arith.constant dense<0.000000e+00> : vector<1xf32>
    %30 = vector.multi_reduction <add>, %29, %cst_11 [1] : vector<1x4xf32> to vector<1xf32>
    %31 = vector.shape_cast %30 : vector<1xf32> to vector<1x1xf32>
    %32 = tpu.reciprocal %31 {approx = true} : vector<1x1xf32> -> vector<1x1xf32>
    %33 = vector.broadcast %32 : vector<1x1xf32> to vector<1x4xf32>
    %34 = arith.mulf %29, %33 : vector<1x4xf32>
    %c0_12 = arith.constant 0 : index
    %c0_13 = arith.constant 0 : index
    %35 = vector.load %arg3[%c0_12, %c0_13] : memref<72x128xf32, #tpu.memory_space<vmem>>, vector<4x36xf32>
    %c8_14 = arith.constant 8 : index
    %c0_15 = arith.constant 0 : index
    %36 = vector.load %arg3[%c8_14, %c0_15] : memref<72x128xf32, #tpu.memory_space<vmem>>, vector<9x36xf32>
    %c24_16 = arith.constant 24 : index
    %c0_17 = arith.constant 0 : index
    %37 = vector.load %arg3[%c24_16, %c0_17] : memref<72x128xf32, #tpu.memory_space<vmem>>, vector<4x32xf32>
    %c32 = arith.constant 32 : index
    %c0_18 = arith.constant 0 : index
    %38 = vector.load %arg3[%c32, %c0_18] : memref<72x128xf32, #tpu.memory_space<vmem>>, vector<8x32xf32>
    %c40 = arith.constant 40 : index
    %c0_19 = arith.constant 0 : index
    %39 = vector.load %arg3[%c40, %c0_19] : memref<72x128xf32, #tpu.memory_space<vmem>>, vector<32x128xf32>
    %cst_20 = arith.constant dense<0.000000e+00> : vector<1x36xf32>
    %40 = tpu.matmul %15, %35, %cst_20 {dimension_numbers = #tpu.dot_dimension_numbers<[1], [0], [0], [1], [0, 0, 1, 1], [], []>} : vector<1x4xf32>, vector<4x36xf32>, vector<1x36xf32> -> vector<1x36xf32>
    %cst_21 = arith.constant dense<0.000000e+00> : vector<1x36xf32>
    %41 = tpu.matmul %27, %36, %cst_21 {dimension_numbers = #tpu.dot_dimension_numbers<[1], [0], [0], [1], [0, 0, 1, 1], [], []>} : vector<1x9xf32>, vector<9x36xf32>, vector<1x36xf32> -> vector<1x36xf32>
    %42 = arith.mulf %40, %41 : vector<1x36xf32>
    %cst_22 = arith.constant dense<0.000000e+00> : vector<1x32xf32>
    %43 = tpu.matmul %34, %37, %cst_22 {dimension_numbers = #tpu.dot_dimension_numbers<[1], [0], [0], [1], [0, 0, 1, 1], [], []>} : vector<1x4xf32>, vector<4x32xf32>, vector<1x32xf32> -> vector<1x32xf32>
    %cst_23 = arith.constant dense<0.000000e+00> : vector<1x32xf32>
    %44 = tpu.matmul %21, %38, %cst_23 {dimension_numbers = #tpu.dot_dimension_numbers<[1], [0], [0], [1], [0, 0, 1, 1], [], []>} : vector<1x8xf32>, vector<8x32xf32>, vector<1x32xf32> -> vector<1x32xf32>
    %45 = arith.mulf %43, %44 : vector<1x32xf32>
    %c0_24 = arith.constant 0 : index
    %c0_25 = arith.constant 0 : index
    %c0_26 = arith.constant 0 : index
    %46 = vector.load %arg4[%c0_24, %c0_25, %c0_26] : memref<1x25x36xbf16, #tpu.memory_space<vmem>>, vector<1x25x36xbf16>
    %47 = vector.shape_cast %46 : vector<1x25x36xbf16> to vector<25x36xbf16>
    %48 = arith.extf %47 : vector<25x36xbf16> to vector<25x36xf32>
    %49 = vector.broadcast %42 : vector<1x36xf32> to vector<25x36xf32>
    %50 = arith.mulf %48, %49 : vector<25x36xf32>
    %51 = arith.truncf %50 : vector<25x36xf32> to vector<25x36xbf16>
    %c0_27 = arith.constant 0 : index
    %c0_28 = arith.constant 0 : index
    %52 = vector.load %arg5[%c0_27, %c0_28] : memref<36x32xbf16, #tpu.memory_space<vmem>>, vector<36x32xbf16>
    %cst_29 = arith.constant dense<0.000000e+00> : vector<25x32xf32>
    %53 = tpu.matmul %51, %52, %cst_29 {dimension_numbers = #tpu.dot_dimension_numbers<[1], [0], [0], [1], [0, 0, 1, 1], [], []>} : vector<25x36xbf16>, vector<36x32xbf16>, vector<25x32xf32> -> vector<25x32xf32>
    %54 = vector.broadcast %45 : vector<1x32xf32> to vector<25x32xf32>
    %55 = arith.mulf %53, %54 : vector<25x32xf32>
    %cst_30 = arith.constant dense<0.000000e+00> : vector<25x128xf32>
    %56 = tpu.matmul %55, %39, %cst_30 {dimension_numbers = #tpu.dot_dimension_numbers<[1], [0], [0], [1], [0, 0, 1, 1], [], []>} : vector<25x32xf32>, vector<32x128xf32>, vector<25x128xf32> -> vector<25x128xf32>
    %c0_31 = arith.constant 0 : index
    %c0_32 = arith.constant 0 : index
    %c0_33 = arith.constant 0 : index
    %57 = vector.load %arg6[%c0_31, %c0_32, %c0_33] : memref<1x25x128xf32, #tpu.memory_space<vmem>>, vector<1x25x128xf32>
    %58 = vector.shape_cast %57 : vector<1x25x128xf32> to vector<25x128xf32>
    %59 = vector.shape_cast %56 : vector<25x128xf32> to vector<1x25x128xf32>
    tpu.vector_store %arg6[%c0_31, %c0_32, %c0_33], %59 {strides = array<i32>} : memref<1x25x128xf32, #tpu.memory_space<vmem>>, vector<1x25x128xf32>,
    return
  }
  func.func @transform_0(%arg0: i32) -> (i32, i32, i32) {
    %c0_i32 = arith.constant 0 : i32
    %c0_i32_0 = arith.constant 0 : i32
    %c0_i32_1 = arith.constant 0 : i32
    return %arg0, %c0_i32, %c0_i32_0 : i32, i32, i32
  }
  func.func @transform_1(%arg0: i32) -> (i32, i32) {
    %c0_i32 = arith.constant 0 : i32
    %c0_i32_0 = arith.constant 0 : i32
    %c0_i32_1 = arith.constant 0 : i32
    return %c0_i32, %c0_i32_0 : i32, i32
  }
  func.func @transform_2(%arg0: i32) -> (i32, i32) {
    %c0_i32 = arith.constant 0 : i32
    %c0_i32_0 = arith.constant 0 : i32
    %c0_i32_1 = arith.constant 0 : i32
    return %c0_i32, %c0_i32_0 : i32, i32
  }
  func.func @transform_3(%arg0: i32) -> (i32, i32, i32) {
    %c0_i32 = arith.constant 0 : i32
    %c0_i32_0 = arith.constant 0 : i32
    %c0_i32_1 = arith.constant 0 : i32
    return %arg0, %c0_i32, %c0_i32_0 : i32, i32, i32
  }
  func.func @transform_4(%arg0: i32) -> (i32, i32) {
    %c0_i32 = arith.constant 0 : i32
    %c0_i32_0 = arith.constant 0 : i32
    %c0_i32_1 = arith.constant 0 : i32
    return %c0_i32, %c0_i32_0 : i32, i32
  }
  func.func @transform_5(%arg0: i32) -> (i32, i32, i32) {
    %c0_i32 = arith.constant 0 : i32
    %c0_i32_0 = arith.constant 0 : i32
    %c0_i32_1 = arith.constant 0 : i32
    return %arg0, %c0_i32, %c0_i32_0 : i32, i32, i32
  }
}

</mosaic_0001>

<llo_original>
// kernel: odconv2d_forward.1
$region0: #{odconv2d_forward.1}
  #allocation0 [shape = 'u32[]', space=smem, size = 0x4, offset = 0x4, fixed_abs, tag = 'smem constant byte address 0x4 - core index']
  #allocation1 [shape = 'u32[144,128]{1,0:T(1,128)}', space=vmem, size = 0x12000, scoped, tag = 'internal scratch']
  %s0 = inlined_call_operand.vmem [shape: f32[2,1,4], index: 0, kind: input, shape index: {}]
  %s1 = inlined_call_operand.vmem [shape: f32[25,25], index: 1, kind: input, shape index: {}]
  %s2 = inlined_call_operand.vmem [shape: f32[72,128], index: 2, kind: input, shape index: {}]
  %s3 = inlined_call_operand.vmem [shape: bf16[2,25,36], index: 3, kind: input, shape index: {}]
  %s4 = inlined_call_operand.vmem [shape: bf16[36,32], index: 4, kind: input, shape index: {}]
  %s5 = inlined_call_operand.vmem [shape: f32[2,25,128], index: 5, kind: output, shape index: {}]
  %s6 = sld [smem:[#allocation0]]
  $region53: #{odconv2d_forward.1} parent=0
    _
  %s8 = ssub.s32 1, %s6
  %s9 = scalar_select 0, %s8, %s6
  loop: start=0, step=1, limit=4
  $region2: #{odconv2d_forward.1} parent=0 // loop_pre_header
    _
  $region3: #{odconv2d_forward.1} parent=0 // loop_header
    %s11 = sphi 0, %s15
    %p12 = scmp.ge.s32.totalorder %s11, 4
    %s21 = sphi 0, %s23
    %s24 = sphi 0, %s21
    %s25 = sphi 0, %s24
    %s41 = sphi 0, %s25
    %s45 = sphi 0, %s45
    %s47 = sphi 0, %s45
    %s48 = sphi 0, %s47
    %s62 = sphi 0, %s48
    %s66 = sphi 0, %s66
    %s68 = sphi 0, %s66
    %s69 = sphi 0, %s68
    %s83 = sphi 0, %s69
    %s89 = sphi 0, %s91
    %s92 = sphi 0, %s89
    %s93 = sphi 0, %s92
    %s109 = sphi 0, %s93
    %s113 = sphi 0, %s113
    %s115 = sphi 0, %s113
    %s116 = sphi 0, %s115
    %s130 = sphi 0, %s116
    %s136 = sphi 0, %s138
    %s139 = sphi 0, %s136
    %s140 = sphi 0, %s139
    %s156 = sphi 0, %s140
  $region4: #{odconv2d_forward.1} parent=0 // loop_header_branch
    %14 = sbr.rel (%p12) target = $region8
  $region5: #{odconv2d_forward.1} parent=0 // loop_body
    %s16 = ssub.s32 %s11, 1
    %s17 = ssub.s32 %s11, 2
    %s18 = sadd.s32 %s11, 1
    %s19 = ssub.s32 %s11, %s18
    %p20 = scmp.eq.s32.totalorder %s19, 0
    %s22 = sadd.s32 %s21, 1
    %s23 = scalar_select %p20, %s21, %s22
    %p26 = pneg %p20
    %p27 = scmp.eq.s32.totalorder %s11, 1
    %p28 = por %p26, %p27
    %p29 = scmp.ne.s32.totalorder %s21, %s24
    %p30 = scmp.eq.s32.totalorder %s11, 0
    %p31 = por %p29, %p30
    %p32 = scmp.ne.s32.totalorder %s21, %s24
    %p33 = scmp.eq.s32.totalorder %s16, 1
    %p34 = por %p32, %p33
    %p35 = scmp.ne.s32.totalorder %s24, %s25
    %p36 = scmp.eq.s32.totalorder %s16, 0
    %p37 = por %p35, %p36
    %p38 = scmp.ne.s32.totalorder %s24, %s25
    %p39 = scmp.eq.s32.totalorder %s17, 1
    %p40 = por %p38, %p39
    %p42 = scmp.ne.s32.totalorder %s25, %s41
    %p43 = scmp.eq.s32.totalorder %s17, 0
    %p44 = por %p42, %p43
    %s46 = sadd.s32 %s45, 1
    %p49 = scmp.eq.s32.totalorder %s11, 1
    %p50 = scmp.ne.s32.totalorder %s45, %s47
    %p51 = scmp.eq.s32.totalorder %s11, 0
    %p52 = por %p50, %p51
    %p53 = scmp.ne.s32.totalorder %s45, %s47
    %p54 = scmp.eq.s32.totalorder %s16, 1
    %p55 = por %p53, %p54
    %p56 = scmp.ne.s32.totalorder %s47, %s48
    %p57 = scmp.eq.s32.totalorder %s16, 0
    %p58 = por %p56, %p57
    %p59 = scmp.ne.s32.totalorder %s47, %s48
    %p60 = scmp.eq.s32.totalorder %s17, 1
    %p61 = por %p59, %p60
    %p63 = scmp.ne.s32.totalorder %s48, %s62
    %p64 = scmp.eq.s32.totalorder %s17, 0
    %p65 = por %p63, %p64
    %s67 = sadd.s32 %s66, 1
    %p70 = scmp.eq.s32.totalorder %s11, 1
    %p71 = scmp.ne.s32.totalorder %s66, %s68
    %p72 = scmp.eq.s32.totalorder %s11, 0
    %p73 = por %p71, %p72
    %p74 = scmp.ne.s32.totalorder %s66, %s68
    %p75 = scmp.eq.s32.totalorder %s16, 1
    %p76 = por %p74, %p75
    %p77 = scmp.ne.s32.totalorder %s68, %s69
    %p78 = scmp.eq.s32.totalorder %s16, 0
    %p79 = por %p77, %p78
    %p80 = scmp.ne.s32.totalorder %s68, %s69
    %p81 = scmp.eq.s32.totalorder %s17, 1
    %p82 = por %p80, %p81
    %p84 = scmp.ne.s32.totalorder %s69, %s83
    %p85 = scmp.eq.s32.totalorder %s17, 0
    %p86 = por %p84, %p85
    %s87 = ssub.s32 %s11, %s18
    %p88 = scmp.eq.s32.totalorder %s87, 0
    %s90 = sadd.s32 %s89, 1
    %s91 = scalar_select %p88, %s89, %s90
    %p94 = pneg %p88
    %p95 = scmp.eq.s32.totalorder %s11, 1
    %p96 = por %p94, %p95
    %p97 = scmp.ne.s32.totalorder %s89, %s92
    %p98 = scmp.eq.s32.totalorder %s11, 0
    %p99 = por %p97, %p98
    %p100 = scmp.ne.s32.totalorder %s89, %s92
    %p101 = scmp.eq.s32.totalorder %s16, 1
    %p102 = por %p100, %p101
    %p103 = scmp.ne.s32.totalorder %s92, %s93
    %p104 = scmp.eq.s32.totalorder %s16, 0
    %p105 = por %p103, %p104
    %p106 = scmp.ne.s32.totalorder %s92, %s93
    %p107 = scmp.eq.s32.totalorder %s17, 1
    %p108 = por %p106, %p107
    %p110 = scmp.ne.s32.totalorder %s93, %s109
    %p111 = scmp.eq.s32.totalorder %s17, 0
    %p112 = por %p110, %p111
    %s114 = sadd.s32 %s113, 1
    %p117 = scmp.eq.s32.totalorder %s11, 1
    %p118 = scmp.ne.s32.totalorder %s113, %s115
    %p119 = scmp.eq.s32.totalorder %s11, 0
    %p120 = por %p118, %p119
    %p121 = scmp.ne.s32.totalorder %s113, %s115
    %p122 = scmp.eq.s32.totalorder %s16, 1
    %p123 = por %p121, %p122
    %p124 = scmp.ne.s32.totalorder %s115, %s116
    %p125 = scmp.eq.s32.totalorder %s16, 0
    %p126 = por %p124, %p125
    %p127 = scmp.ne.s32.totalorder %s115, %s116
    %p128 = scmp.eq.s32.totalorder %s17, 1
    %p129 = por %p127, %p128
    %p131 = scmp.ne.s32.totalorder %s116, %s130
    %p132 = scmp.eq.s32.totalorder %s17, 0
    %p133 = por %p131, %p132
    %s134 = ssub.s32 %s11, %s18
    %p135 = scmp.eq.s32.totalorder %s134, 0
    %s137 = sadd.s32 %s136, 1
    %s138 = scalar_select %p135, %s136, %s137
    %p141 = pneg %p135
    %p142 = scmp.eq.s32.totalorder %s11, 1
    %p143 = por %p141, %p142
    %p144 = scmp.ne.s32.totalorder %s136, %s139
    %p145 = scmp.eq.s32.totalorder %s11, 0
    %p146 = por %p144, %p145
    %p147 = scmp.ne.s32.totalorder %s136, %s139
    %p148 = scmp.eq.s32.totalorder %s16, 1
    %p149 = por %p147, %p148
    %p150 = scmp.ne.s32.totalorder %s139, %s140
    %p151 = scmp.eq.s32.totalorder %s16, 0
    %p152 = por %p150, %p151
    %p153 = scmp.ne.s32.totalorder %s139, %s140
    %p154 = scmp.eq.s32.totalorder %s17, 1
    %p155 = por %p153, %p154
    %p157 = scmp.ne.s32.totalorder %s140, %s156
    %p158 = scmp.eq.s32.totalorder %s17, 0
    %p159 = por %p157, %p158
    %p160 = scmp.le.s32.totalorder 1, %s11
    %p161 = scmp.lt.s32.totalorder %s11, 3
    %p162 = pnand %p160, %p161
    %p163 = pneg %p162
    // Predicated region
    $region9: #{odconv2d_forward.1} parent=5 // pred_check
      _
    $region10: #{odconv2d_forward.1} parent=5 // pred_check_branch
      %165 = sbr.rel (%p162) target = $region12
    $region11: #{odconv2d_forward.1} parent=5 // pred_region
      %s166 = ssub.s32 %s11, 1
      // Predicated region
      $region13: #{odconv2d_forward.1} parent=11 // pred_check
        %p167 = pneg %p58
      $region14: #{odconv2d_forward.1} parent=11 // pred_check_branch
        %169 = sbr.rel (%p167) target = $region16
      $region15: #{odconv2d_forward.1} parent=11 // pred_region
        _
      $region16: #{odconv2d_forward.1} parent=11 // pred_fallthru
        _
      // Predicated region
      $region17: #{odconv2d_forward.1} parent=11 // pred_check
        %p170 = pneg %p79
      $region18: #{odconv2d_forward.1} parent=11 // pred_check_branch
        %172 = sbr.rel (%p170) target = $region20
      $region19: #{odconv2d_forward.1} parent=11 // pred_region
        _
      $region20: #{odconv2d_forward.1} parent=11 // pred_fallthru
        _
      // Predicated region
      $region21: #{odconv2d_forward.1} parent=11 // pred_check
        %p173 = pneg %p126
      $region22: #{odconv2d_forward.1} parent=11 // pred_check_branch
        %175 = sbr.rel (%p173) target = $region24
      $region23: #{odconv2d_forward.1} parent=11 // pred_region
        _
      $region24: #{odconv2d_forward.1} parent=11 // pred_fallthru
        _
    $region12: #{odconv2d_forward.1} parent=5 // pred_fallthru
      _
    %p176 = scmp.lt.s32.totalorder %s11, 2
    // Predicated region
    $region25: #{odconv2d_forward.1} parent=5 // pred_check
      %p177 = pneg %p176
    $region26: #{odconv2d_forward.1} parent=5 // pred_check_branch
      %179 = sbr.rel (%p177) target = $region28
    $region27: #{odconv2d_forward.1} parent=5 // pred_region
      // Predicated region
      $region29: #{odconv2d_forward.1} parent=27 // pred_check
        %p180 = pneg %p31
      $region30: #{odconv2d_forward.1} parent=27 // pred_check_branch
        %182 = sbr.rel (%p180) target = $region32
      $region31: #{odconv2d_forward.1} parent=27 // pred_region
        %p183 = scmp.lt.s32.totalorder %s11, 1
        %s184 = scalar_select %p183, %s11, 1
        %s185 = scalar_lea.vmem %s0, %s184
      $region32: #{odconv2d_forward.1} parent=27 // pred_fallthru
        _
      // Predicated region
      $region33: #{odconv2d_forward.1} parent=27 // pred_check
        %p186 = pneg %p99
      $region34: #{odconv2d_forward.1} parent=27 // pred_check_branch
        %188 = sbr.rel (%p186) target = $region36
      $region35: #{odconv2d_forward.1} parent=27 // pred_region
        %p189 = scmp.lt.s32.totalorder %s11, 1
        %s190 = scalar_select %p189, %s11, 1
        %s191 = smul.addr %s190, 4
        %s192 = smul.addr %s191, 4
        %s193 = scalar_lea.vmem %s3, %s192
      $region36: #{odconv2d_forward.1} parent=27 // pred_fallthru
        _
    $region28: #{odconv2d_forward.1} parent=5 // pred_fallthru
      _
    %p194 = scmp.le.s32.totalorder 1, %s11
    %p195 = scmp.lt.s32.totalorder %s11, 3
    %p196 = pnand %p194, %p195
    %p197 = pneg %p196
    // Predicated region
    $region37: #{odconv2d_forward.1} parent=5 // pred_check
      _
    $region38: #{odconv2d_forward.1} parent=5 // pred_check_branch
      %199 = sbr.rel (%p196) target = $region40
    $region39: #{odconv2d_forward.1} parent=5 // pred_region
      %s200 = ssub.s32 %s11, 1
      %p201 = scmp.lt.s32.totalorder %s16, 1
      %s202 = scalar_select %p201, %s16, 1
      %s203 = scalar_lea.vmem %s0, %s202
      %p204 = pneg %p37
      %p205 = pneg %p34
      %p206 = pneg %p58
      %p207 = pneg %p55
      %p208 = pneg %p79
      %p209 = pneg %p76
      %p210 = scmp.lt.s32.totalorder %s16, 1
      %s211 = scalar_select %p210, %s16, 1
      %s212 = smul.addr %s211, 4
      %s213 = smul.addr %s212, 4
      %s214 = scalar_lea.vmem %s3, %s213
      %p215 = pneg %p105
      %p216 = pneg %p102
      %p217 = pneg %p126
      %p218 = pneg %p123
      %p219 = pneg %p152
      %p220 = pneg %p149
      %p221 = scmp.lt.s32.totalorder %s16, 1
      %s222 = scalar_select %p221, %s16, 1
      %s223 = smul.addr %s222, 4
      %s224 = smul.addr %s223, 8
      %s225 = scalar_lea.vmem %s5, %s224
      %p226 = scmp.lt.s32.totalorder %s16, 1
      %s227 = scalar_select %p226, %s16, 1
      %s228 = scalar_lea.vmem %s0, %s227
      %p229 = scmp.lt.s32.totalorder %s16, 1
      %s230 = scalar_select %p229, %s16, 1
      %s231 = smul.addr %s230, 4
      %s232 = smul.addr %s231, 4
      %s233 = scalar_lea.vmem %s3, %s232
      %p234 = scmp.lt.s32.totalorder %s16, 1
      %s235 = scalar_select %p234, %s16, 1
      %s236 = smul.addr %s235, 4
      %s237 = smul.addr %s236, 8
      %s238 = scalar_lea.vmem %s5, %s237
      %v240 = vld [vmem:[%s228] sm:$0x1]
      %v241 = vld [vmem:[%s1] sm:$0xf]
      %vm242 = vcmask 31744
      %v244 = vsel %vm242, %v240, 0
      %vm246 = vcmask 1043456
      %v248 = vsel %vm246, %v241, 0
      %250 = vmatprep.subr.mxu0 0.0
      %251 = vmatpush1.msra.mxu0 %v248
      %252 = vmatprep.subr.mxu0 0.0
      %253 = vmatpush1.msra.mxu0 0.0
      %254 = vmatprep.subr.mxu0 0.0
      %255 = vmatpush1.msra.mxu0 0.0
      %256 = vmatprep.subr.mxu0 0.0
      %257 = vmatpush1.msra.mxu0 0.0
      %258 = vmatprep.subr.mxu0 0.0
      %259 = vmatpush1.msra.mxu0 0.0
      %260 = vmatprep.subr.mxu0 0.0
      %261 = vmatpush1.msra.mxu0 0.0
      %262 = vmatprep.subr.mxu0 0.0
      %263 = vmatpush1.msra.mxu0 0.0
      %264 = vmatprep.subr.mxu0 0.0
      %265 = vmatpush1.msra.mxu0 0.0
      %266 = vmatprep.subr.mxu0 0.0
      %267 = vmatpush1.msra.mxu0 0.0
      %268 = vmatprep.subr.mxu0 0.0
      %269 = vmatpush1.msra.mxu0 0.0
      %270 = vmatprep.subr.mxu0 0.0
      %271 = vmatpush1.msra.mxu0 0.0
      %272 = vmatprep.subr.mxu0 0.0
      %273 = vmatpush1.msra.mxu0 0.0
      %274 = vmatprep.subr.mxu0 0.0
      %275 = vmatpush1.msra.mxu0 0.0
      %276 = vmatprep.subr.mxu0 0.0
      %277 = vmatpush1.msra.mxu0 0.0
      %278 = vmatprep.subr.mxu0 0.0
      %279 = vmatpush1.msra.mxu0 0.0
      %280 = vmatprep.subr.mxu0 0.0
      %281 = vmatpush1.msra.mxu0 0.0
      %282 = vmatprep.subr.mxu0 0.0
      %283 = vmatpush1.msra.mxu0 0.0
      %284 = vmatprep.subr.mxu0 0.0
      %285 = vmatpush1.msra.mxu0 0.0
      %286 = vmatprep.subr.mxu0 0.0
      %287 = vmatpush1.msra.mxu0 0.0
      %288 = vmatprep.subr.mxu0 0.0
      %289 = vmatpush1.msra.mxu0 0.0
      %290 = vmatprep.subr.mxu0 0.0
      %291 = vmatpush1.msra.mxu0 0.0
      %292 = vmatprep.subr.mxu0 0.0
      %293 = vmatpush1.msra.mxu0 0.0
      %294 = vmatprep.subr.mxu0 0.0
      %295 = vmatpush1.msra.mxu0 0.0
      %296 = vmatprep.subr.mxu0 0.0
      %297 = vmatpush1.msra.mxu0 0.0
      %298 = vmatprep.subr.mxu0 0.0
      %299 = vmatpush1.msra.mxu0 0.0
      %300 = vmatprep.subr.mxu0 0.0
      %301 = vmatpush1.msra.mxu0 0.0
      %302 = vmatprep.subr.mxu0 0.0
      %303 = vmatpush1.msra.mxu0 0.0
      %304 = vmatprep.subr.mxu0 0.0
      %305 = vmatpush1.msra.mxu0 0.0
      %306 = vmatprep.subr.mxu0 0.0
      %307 = vmatpush1.msra.mxu0 0.0
      %308 = vmatprep.subr.mxu0 0.0
      %309 = vmatpush1.msra.mxu0 0.0
      %310 = vmatprep.subr.mxu0 0.0
      %311 = vmatpush1.msra.mxu0 0.0
      %312 = vmatprep.subr.mxu0 0.0
      %313 = vmatpush1.msra.mxu0 0.0
      %314 = vmatprep.mubr.f32.mxu0 0.0
      %315 = vmatmul.mubr.f32.gmra.mrb[0].mxu0 %v244
      %v316 = vpop.f32.mrb[0].mxu0
      %v317 = vadd.f32 0.0, %v316
      %v318 = vpop.f32.mrb[0].mxu0
      %319 = vdwg.mxu0
      %v320 = vmax.f32 %v317, 0.0
      %v321 = vld [vmem:[%s1 + $0x8] sm:$0xff]
      %v322 = vld [vmem:[%s1 + $0x10] sm:$0xff]
      %v323 = vld [vmem:[%s1 + $0x18] sm:$0x1]
      %vm324 = vcmask 130048
      %v326 = vsel %vm324, %v320, 0
      %328 = vmatprep.subr.mxu0 0.0
      %329 = vmatpush1.msra.mxu0 %v321
      %330 = vmatprep.subr.mxu0 0.0
      %331 = vmatpush1.msra.mxu0 %v322
      %332 = vmatprep.subr.mxu0 0.0
      %333 = vmatpush1.msra.mxu0 0.0
      %334 = vmatprep.subr.mxu0 0.0
      %335 = vmatpush1.msra.mxu0 0.0
      %336 = vmatprep.subr.mxu0 0.0
      %337 = vmatpush1.msra.mxu0 0.0
      %338 = vmatprep.subr.mxu0 0.0
      %339 = vmatpush1.msra.mxu0 0.0
      %340 = vmatprep.subr.mxu0 0.0
      %341 = vmatpush1.msra.mxu0 0.0
      %342 = vmatprep.subr.mxu0 0.0
      %343 = vmatpush1.msra.mxu0 0.0
      %344 = vmatprep.subr.mxu0 0.0
      %345 = vmatpush1.msra.mxu0 0.0
      %346 = vmatprep.subr.mxu0 0.0
      %347 = vmatpush1.msra.mxu0 0.0
      %348 = vmatprep.subr.mxu0 0.0
      %349 = vmatpush1.msra.mxu0 0.0
      %350 = vmatprep.subr.mxu0 0.0
      %351 = vmatpush1.msra.mxu0 0.0
      %352 = vmatprep.subr.mxu0 0.0
      %353 = vmatpush1.msra.mxu0 0.0
      %354 = vmatprep.subr.mxu0 0.0
      %355 = vmatpush1.msra.mxu0 0.0
      %356 = vmatprep.subr.mxu0 0.0
      %357 = vmatpush1.msra.mxu0 0.0
      %358 = vmatprep.subr.mxu0 0.0
      %359 = vmatpush1.msra.mxu0 0.0
      %360 = vmatprep.subr.mxu0 0.0
      %361 = vmatpush1.msra.mxu0 0.0
      %362 = vmatprep.subr.mxu0 0.0
      %363 = vmatpush1.msra.mxu0 0.0
      %364 = vmatprep.subr.mxu0 0.0
      %365 = vmatpush1.msra.mxu0 0.0
      %366 = vmatprep.subr.mxu0 0.0
      %367 = vmatpush1.msra.mxu0 0.0
      %368 = vmatprep.subr.mxu0 0.0
      %369 = vmatpush1.msra.mxu0 0.0
      %370 = vmatprep.subr.mxu0 0.0
      %371 = vmatpush1.msra.mxu0 0.0
      %372 = vmatprep.subr.mxu0 0.0
      %373 = vmatpush1.msra.mxu0 0.0
      %374 = vmatprep.subr.mxu0 0.0
      %375 = vmatpush1.msra.mxu0 0.0
      %376 = vmatprep.subr.mxu0 0.0
      %377 = vmatpush1.msra.mxu0 0.0
      %378 = vmatprep.subr.mxu0 0.0
      %379 = vmatpush1.msra.mxu0 0.0
      %380 = vmatprep.subr.mxu0 0.0
      %381 = vmatpush1.msra.mxu0 0.0
      %382 = vmatprep.subr.mxu0 0.0
      %383 = vmatpush1.msra.mxu0 0.0
      %384 = vmatprep.subr.mxu0 0.0
      %385 = vmatpush1.msra.mxu0 0.0
      %386 = vmatprep.subr.mxu0 0.0
      %387 = vmatpush1.msra.mxu0 0.0
      %388 = vmatprep.subr.mxu0 0.0
      %389 = vmatpush1.msra.mxu0 0.0
      %390 = vmatprep.subr.mxu0 0.0
      %391 = vmatpush1.msra.mxu0 0.0
      %392 = vmatprep.mubr.f32.mxu0 0.0
      %393 = vmatmul.mubr.f32.gmra.mrb[0].mxu0 %v326
      %v394 = vpop.f32.mrb[0].mxu0
      %v395 = vadd.f32 %v323, %v394
      %v396 = vpop.f32.mrb[0].mxu0
      %397 = vdwg.mxu0
      %v398 = vxor.u32 %v395, 2147483648
      %v399 = vmul.f32 %v398, 1.442695
      %v400 = vpow.pop %v399
      %v401 = vadd.f32 %v400, 1.0
      %v402 = vrcp.pop %v401
      %v403 = vmul.f32 1.0, %v402
      %v404 = vmul.f32 %v395, 1.442695
      %v405 = vpow.pop %v404
      %407 = vrot.lane.b32.xlu0 %v405, 107
      %v408 = vpop.permute.xlu0 %407
      %vm410 = vcmask 24576
      %v411 = vsel %vm410, %v408, 0.0
      %412 = vadd.xlane.f32.xlu0 %v411
      %v413 = vpop.xlane.xlu0 %412
      %v414 = vrcp.pop %v413
      %v415 = vmul.f32 %v405, %v414
      %v416 = vld [vmem:[%s2] sm:$0xf]
      %v417 = vld [vmem:[%s2 + $0x8] sm:$0xff]
      %v418 = vld [vmem:[%s2 + $0x10] sm:$0x1]
      %v419 = vld [vmem:[%s2 + $0x18] sm:$0xf]
      %v420 = vld [vmem:[%s2 + $0x20] sm:$0xff]
      %v421 = vld [vmem:[%s2 + $0x28] sm:$0xff]
      %v422 = vld [vmem:[%s2 + $0x30] sm:$0xff]
      %v423 = vld [vmem:[%s2 + $0x38] sm:$0xff]
      %v424 = vld [vmem:[%s2 + $0x40] sm:$0xff]
      %v426 = vsel %vm242, %v403, 0
      %v429 = vsel %vm246, %v416, 0
      %431 = vmatprep.subr.mxu0 0.0
      %432 = vmatpush1.msra.mxu0 %v429
      %433 = vmatprep.subr.mxu0 0.0
      %434 = vmatpush1.msra.mxu0 0.0
      %435 = vmatprep.subr.mxu0 0.0
      %436 = vmatpush1.msra.mxu0 0.0
      %437 = vmatprep.subr.mxu0 0.0
      %438 = vmatpush1.msra.mxu0 0.0
      %439 = vmatprep.subr.mxu0 0.0
      %440 = vmatpush1.msra.mxu0 0.0
      %441 = vmatprep.subr.mxu0 0.0
      %442 = vmatpush1.msra.mxu0 0.0
      %443 = vmatprep.subr.mxu0 0.0
      %444 = vmatpush1.msra.mxu0 0.0
      %445 = vmatprep.subr.mxu0 0.0
      %446 = vmatpush1.msra.mxu0 0.0
      %447 = vmatprep.subr.mxu0 0.0
      %448 = vmatpush1.msra.mxu0 0.0
      %449 = vmatprep.subr.mxu0 0.0
      %450 = vmatpush1.msra.mxu0 0.0
      %451 = vmatprep.subr.mxu0 0.0
      %452 = vmatpush1.msra.mxu0 0.0
      %453 = vmatprep.subr.mxu0 0.0
      %454 = vmatpush1.msra.mxu0 0.0
      %455 = vmatprep.subr.mxu0 0.0
      %456 = vmatpush1.msra.mxu0 0.0
      %457 = vmatprep.subr.mxu0 0.0
      %458 = vmatpush1.msra.mxu0 0.0
      %459 = vmatprep.subr.mxu0 0.0
      %460 = vmatpush1.msra.mxu0 0.0
      %461 = vmatprep.subr.mxu0 0.0
      %462 = vmatpush1.msra.mxu0 0.0
      %463 = vmatprep.subr.mxu0 0.0
      %464 = vmatpush1.msra.mxu0 0.0
      %465 = vmatprep.subr.mxu0 0.0
      %466 = vmatpush1.msra.mxu0 0.0
      %467 = vmatprep.subr.mxu0 0.0
      %468 = vmatpush1.msra.mxu0 0.0
      %469 = vmatprep.subr.mxu0 0.0
      %470 = vmatpush1.msra.mxu0 0.0
      %471 = vmatprep.subr.mxu0 0.0
      %472 = vmatpush1.msra.mxu0 0.0
      %473 = vmatprep.subr.mxu0 0.0
      %474 = vmatpush1.msra.mxu0 0.0
      %475 = vmatprep.subr.mxu0 0.0
      %476 = vmatpush1.msra.mxu0 0.0
      %477 = vmatprep.subr.mxu0 0.0
      %478 = vmatpush1.msra.mxu0 0.0
      %479 = vmatprep.subr.mxu0 0.0
      %480 = vmatpush1.msra.mxu0 0.0
      %481 = vmatprep.subr.mxu0 0.0
      %482 = vmatpush1.msra.mxu0 0.0
      %483 = vmatprep.subr.mxu0 0.0
      %484 = vmatpush1.msra.mxu0 0.0
      %485 = vmatprep.subr.mxu0 0.0
      %486 = vmatpush1.msra.mxu0 0.0
      %487 = vmatprep.subr.mxu0 0.0
      %488 = vmatpush1.msra.mxu0 0.0
      %489 = vmatprep.subr.mxu0 0.0
      %490 = vmatpush1.msra.mxu0 0.0
      %491 = vmatprep.subr.mxu0 0.0
      %492 = vmatpush1.msra.mxu0 0.0
      %493 = vmatprep.subr.mxu0 0.0
      %494 = vmatpush1.msra.mxu0 0.0
      %495 = vmatprep.mubr.f32.mxu0 0.0
      %496 = vmatmul.mubr.f32.gmra.mrb[0].mxu0 %v426
      %v497 = vpop.f32.mrb[0].mxu0
      %v498 = vadd.f32 0.0, %v497
      %v499 = vpop.f32.mrb[0].mxu0
      %500 = vdwg.mxu0
      %501 = vrot.lane.b32.xlu0 %v403, 116
      %v502 = vpop.permute.xlu0 %501
      %vm503 = vcmask 72704
      %v504 = vsel %vm503, %v502, 0
      %vm506 = vcmask 1040384
      %v508 = vsel %vm506, %v418, 0
      %510 = vmatprep.subr.mxu0 0.0
      %511 = vmatpush1.msra.mxu0 %v417
      %512 = vmatprep.subr.mxu0 0.0
      %513 = vmatpush1.msra.mxu0 %v508
      %514 = vmatprep.subr.mxu0 0.0
      %515 = vmatpush1.msra.mxu0 0.0
      %516 = vmatprep.subr.mxu0 0.0
      %517 = vmatpush1.msra.mxu0 0.0
      %518 = vmatprep.subr.mxu0 0.0
      %519 = vmatpush1.msra.mxu0 0.0
      %520 = vmatprep.subr.mxu0 0.0
      %521 = vmatpush1.msra.mxu0 0.0
      %522 = vmatprep.subr.mxu0 0.0
      %523 = vmatpush1.msra.mxu0 0.0
      %524 = vmatprep.subr.mxu0 0.0
      %525 = vmatpush1.msra.mxu0 0.0
      %526 = vmatprep.subr.mxu0 0.0
      %527 = vmatpush1.msra.mxu0 0.0
      %528 = vmatprep.subr.mxu0 0.0
      %529 = vmatpush1.msra.mxu0 0.0
      %530 = vmatprep.subr.mxu0 0.0
      %531 = vmatpush1.msra.mxu0 0.0
      %532 = vmatprep.subr.mxu0 0.0
      %533 = vmatpush1.msra.mxu0 0.0
      %534 = vmatprep.subr.mxu0 0.0
      %535 = vmatpush1.msra.mxu0 0.0
      %536 = vmatprep.subr.mxu0 0.0
      %537 = vmatpush1.msra.mxu0 0.0
      %538 = vmatprep.subr.mxu0 0.0
      %539 = vmatpush1.msra.mxu0 0.0
      %540 = vmatprep.subr.mxu0 0.0
      %541 = vmatpush1.msra.mxu0 0.0
      %542 = vmatprep.subr.mxu0 0.0
      %543 = vmatpush1.msra.mxu0 0.0
      %544 = vmatprep.subr.mxu0 0.0
      %545 = vmatpush1.msra.mxu0 0.0
      %546 = vmatprep.subr.mxu0 0.0
      %547 = vmatpush1.msra.mxu0 0.0
      %548 = vmatprep.subr.mxu0 0.0
      %549 = vmatpush1.msra.mxu0 0.0
      %550 = vmatprep.subr.mxu0 0.0
      %551 = vmatpush1.msra.mxu0 0.0
      %552 = vmatprep.subr.mxu0 0.0
      %553 = vmatpush1.msra.mxu0 0.0
      %554 = vmatprep.subr.mxu0 0.0
      %555 = vmatpush1.msra.mxu0 0.0
      %556 = vmatprep.subr.mxu0 0.0
      %557 = vmatpush1.msra.mxu0 0.0
      %558 = vmatprep.subr.mxu0 0.0
      %559 = vmatpush1.msra.mxu0 0.0
      %560 = vmatprep.subr.mxu0 0.0
      %561 = vmatpush1.msra.mxu0 0.0
      %562 = vmatprep.subr.mxu0 0.0
      %563 = vmatpush1.msra.mxu0 0.0
      %564 = vmatprep.subr.mxu0 0.0
      %565 = vmatpush1.msra.mxu0 0.0
      %566 = vmatprep.subr.mxu0 0.0
      %567 = vmatpush1.msra.mxu0 0.0
      %568 = vmatprep.subr.mxu0 0.0
      %569 = vmatpush1.msra.mxu0 0.0
      %570 = vmatprep.subr.mxu0 0.0
      %571 = vmatpush1.msra.mxu0 0.0
      %572 = vmatprep.subr.mxu0 0.0
      %573 = vmatpush1.msra.mxu0 0.0
      %574 = vmatprep.mubr.f32.mxu0 0.0
      %575 = vmatmul.mubr.f32.gmra.mrb[0].mxu0 %v504
      %v576 = vpop.f32.mrb[0].mxu0
      %v577 = vadd.f32 0.0, %v576
      %v578 = vpop.f32.mrb[0].mxu0
      %579 = vdwg.mxu0
      %v580 = vmul.f32 %v498, %v577
      %582 = vrot.lane.b32.xlu0 %v415, 107
      %v583 = vpop.permute.xlu0 %582
      %v584 = vsel %vm242, %v583, 0
      %v587 = vsel %vm246, %v419, 0
      %589 = vmatprep.subr.mxu0 0.0
      %590 = vmatpush1.msra.mxu0 %v587
      %591 = vmatprep.subr.mxu0 0.0
      %592 = vmatpush1.msra.mxu0 0.0
      %593 = vmatprep.subr.mxu0 0.0
      %594 = vmatpush1.msra.mxu0 0.0
      %595 = vmatprep.subr.mxu0 0.0
      %596 = vmatpush1.msra.mxu0 0.0
      %597 = vmatprep.subr.mxu0 0.0
      %598 = vmatpush1.msra.mxu0 0.0
      %599 = vmatprep.subr.mxu0 0.0
      %600 = vmatpush1.msra.mxu0 0.0
      %601 = vmatprep.subr.mxu0 0.0
      %602 = vmatpush1.msra.mxu0 0.0
      %603 = vmatprep.subr.mxu0 0.0
      %604 = vmatpush1.msra.mxu0 0.0
      %605 = vmatprep.subr.mxu0 0.0
      %606 = vmatpush1.msra.mxu0 0.0
      %607 = vmatprep.subr.mxu0 0.0
      %608 = vmatpush1.msra.mxu0 0.0
      %609 = vmatprep.subr.mxu0 0.0
      %610 = vmatpush1.msra.mxu0 0.0
      %611 = vmatprep.subr.mxu0 0.0
      %612 = vmatpush1.msra.mxu0 0.0
      %613 = vmatprep.subr.mxu0 0.0
      %614 = vmatpush1.msra.mxu0 0.0
      %615 = vmatprep.subr.mxu0 0.0
      %616 = vmatpush1.msra.mxu0 0.0
      %617 = vmatprep.subr.mxu0 0.0
      %618 = vmatpush1.msra.mxu0 0.0
      %619 = vmatprep.subr.mxu0 0.0
      %620 = vmatpush1.msra.mxu0 0.0
      %621 = vmatprep.subr.mxu0 0.0
      %622 = vmatpush1.msra.mxu0 0.0
      %623 = vmatprep.subr.mxu0 0.0
      %624 = vmatpush1.msra.mxu0 0.0
      %625 = vmatprep.subr.mxu0 0.0
      %626 = vmatpush1.msra.mxu0 0.0
      %627 = vmatprep.subr.mxu0 0.0
      %628 = vmatpush1.msra.mxu0 0.0
      %629 = vmatprep.subr.mxu0 0.0
      %630 = vmatpush1.msra.mxu0 0.0
      %631 = vmatprep.subr.mxu0 0.0
      %632 = vmatpush1.msra.mxu0 0.0
      %633 = vmatprep.subr.mxu0 0.0
      %634 = vmatpush1.msra.mxu0 0.0
      %635 = vmatprep.subr.mxu0 0.0
      %636 = vmatpush1.msra.mxu0 0.0
      %637 = vmatprep.subr.mxu0 0.0
      %638 = vmatpush1.msra.mxu0 0.0
      %639 = vmatprep.subr.mxu0 0.0
      %640 = vmatpush1.msra.mxu0 0.0
      %641 = vmatprep.subr.mxu0 0.0
      %642 = vmatpush1.msra.mxu0 0.0
      %643 = vmatprep.subr.mxu0 0.0
      %644 = vmatpush1.msra.mxu0 0.0
      %645 = vmatprep.subr.mxu0 0.0
      %646 = vmatpush1.msra.mxu0 0.0
      %647 = vmatprep.subr.mxu0 0.0
      %648 = vmatpush1.msra.mxu0 0.0
      %649 = vmatprep.subr.mxu0 0.0
      %650 = vmatpush1.msra.mxu0 0.0
      %651 = vmatprep.subr.mxu0 0.0
      %652 = vmatpush1.msra.mxu0 0.0
      %653 = vmatprep.mubr.f32.mxu0 0.0
      %654 = vmatmul.mubr.f32.gmra.mrb[0].mxu0 %v584
      %v655 = vpop.f32.mrb[0].mxu0
      %v656 = vadd.f32 0.0, %v655
      %v657 = vpop.f32.mrb[0].mxu0
      %658 = vdwg.mxu0
      %659 = vrot.lane.b32.xlu0 %v403, 124
      %v660 = vpop.permute.xlu0 %659
      %vm661 = vcmask 64512
      %v662 = vsel %vm661, %v660, 0
      %664 = vmatprep.subr.mxu0 0.0
      %665 = vmatpush1.msra.mxu0 %v420
      %666 = vmatprep.subr.mxu0 0.0
      %667 = vmatpush1.msra.mxu0 0.0
      %668 = vmatprep.subr.mxu0 0.0
      %669 = vmatpush1.msra.mxu0 0.0
      %670 = vmatprep.subr.mxu0 0.0
      %671 = vmatpush1.msra.mxu0 0.0
      %672 = vmatprep.subr.mxu0 0.0
      %673 = vmatpush1.msra.mxu0 0.0
      %674 = vmatprep.subr.mxu0 0.0
      %675 = vmatpush1.msra.mxu0 0.0
      %676 = vmatprep.subr.mxu0 0.0
      %677 = vmatpush1.msra.mxu0 0.0
      %678 = vmatprep.subr.mxu0 0.0
      %679 = vmatpush1.msra.mxu0 0.0
      %680 = vmatprep.subr.mxu0 0.0
      %681 = vmatpush1.msra.mxu0 0.0
      %682 = vmatprep.subr.mxu0 0.0
      %683 = vmatpush1.msra.mxu0 0.0
      %684 = vmatprep.subr.mxu0 0.0
      %685 = vmatpush1.msra.mxu0 0.0
      %686 = vmatprep.subr.mxu0 0.0
      %687 = vmatpush1.msra.mxu0 0.0
      %688 = vmatprep.subr.mxu0 0.0
      %689 = vmatpush1.msra.mxu0 0.0
      %690 = vmatprep.subr.mxu0 0.0
      %691 = vmatpush1.msra.mxu0 0.0
      %692 = vmatprep.subr.mxu0 0.0
      %693 = vmatpush1.msra.mxu0 0.0
      %694 = vmatprep.subr.mxu0 0.0
      %695 = vmatpush1.msra.mxu0 0.0
      %696 = vmatprep.subr.mxu0 0.0
      %697 = vmatpush1.msra.mxu0 0.0
      %698 = vmatprep.subr.mxu0 0.0
      %699 = vmatpush1.msra.mxu0 0.0
      %700 = vmatprep.subr.mxu0 0.0
      %701 = vmatpush1.msra.mxu0 0.0
      %702 = vmatprep.subr.mxu0 0.0
      %703 = vmatpush1.msra.mxu0 0.0
      %704 = vmatprep.subr.mxu0 0.0
      %705 = vmatpush1.msra.mxu0 0.0
      %706 = vmatprep.subr.mxu0 0.0
      %707 = vmatpush1.msra.mxu0 0.0
      %708 = vmatprep.subr.mxu0 0.0
      %709 = vmatpush1.msra.mxu0 0.0
      %710 = vmatprep.subr.mxu0 0.0
      %711 = vmatpush1.msra.mxu0 0.0
      %712 = vmatprep.subr.mxu0 0.0
      %713 = vmatpush1.msra.mxu0 0.0
      %714 = vmatprep.subr.mxu0 0.0
      %715 = vmatpush1.msra.mxu0 0.0
      %716 = vmatprep.subr.mxu0 0.0
      %717 = vmatpush1.msra.mxu0 0.0
      %718 = vmatprep.subr.mxu0 0.0
      %719 = vmatpush1.msra.mxu0 0.0
      %720 = vmatprep.subr.mxu0 0.0
      %721 = vmatpush1.msra.mxu0 0.0
      %722 = vmatprep.subr.mxu0 0.0
      %723 = vmatpush1.msra.mxu0 0.0
      %724 = vmatprep.subr.mxu0 0.0
      %725 = vmatpush1.msra.mxu0 0.0
      %726 = vmatprep.subr.mxu0 0.0
      %727 = vmatpush1.msra.mxu0 0.0
      %728 = vmatprep.mubr.f32.mxu0 0.0
      %729 = vmatmul.mubr.f32.gmra.mrb[0].mxu0 %v662
      %v730 = vpop.f32.mrb[0].mxu0
      %v731 = vadd.f32 0.0, %v730
      %v732 = vpop.f32.mrb[0].mxu0
      %733 = vdwg.mxu0
      %v734 = vmul.f32 %v656, %v731
      %v735 = vld [vmem:[%s233] sm:$0xf]
      %v736 = vld [vmem:[%s233 + $0x4] sm:$0xf]
      %v737 = vld [vmem:[%s233 + $0x8] sm:$0xf]
      %v738 = vld [vmem:[%s233 + $0xc] sm:$0x1]
      %v739 = vunpack.c.l.bf16 %v735
      %v740 = vunpack.c.l.bf16 %v736
      %v741 = vunpack.c.l.bf16 %v737
      %v742 = vunpack.c.l.bf16 %v738
      %v743 = vlaneseq
      %v744 = vshrl.u32 %v743, 7
      %v745 = vsub.s32 0, %v744
      %v746 = vrot.slane %v580, %v745
      %v747 = vmul.f32 %v739, %v746
      %v748 = vmul.f32 %v740, %v746
      %v749 = vmul.f32 %v741, %v746
      %v750 = vmul.f32 %v742, %v746
      %v751 = vpack.c.bf16 %v748, %v747
      %v752 = vpack.c.bf16 %v750, %v749
      %v753 = vld [vmem:[%s4] sm:$0xf]
      %v754 = vld [vmem:[%s4 + $0x4] sm:$0xf]
      %v755 = vld [vmem:[%s4 + $0x8] sm:$0xf]
      %v756 = vld [vmem:[%s4 + $0xc] sm:$0xf]
      %v757 = vld [vmem:[%s4 + $0x10] sm:$0x3]
      %v763 = vunpack.c.l.b16 %v753
      %v764 = vunpack.c.l.b16 %v754
      %v765 = vunpack.c.l.b16 %v755
      %v766 = vunpack.c.l.b16 %v756
      %v767 = vunpack.c.l.b16 %v757
      %v768 = vpack.c.b16 %v764, %v763
      %v769 = vpack.c.b16 %v766, %v765
      %v770 = vpack.c.b16 %v767, %v767
      %vm773 = vcmask 293888
      %v775 = vsel %vm773, %v751, 0
      %v778 = vsel %vm773, %v752, 0
      %vm780 = vcmask 1041408
      %v782 = vsel %vm780, %v770, 0
      %784 = vmatprep.subr.bf16.mxu0 0
      %785 = vmatpush1.bf16.msra.mxu0 %v768
      %786 = vmatprep.subr.bf16.mxu0 0
      %787 = vmatpush1.bf16.msra.mxu0 %v769
      %788 = vmatprep.subr.bf16.mxu0 0
      %789 = vmatpush1.bf16.msra.mxu0 %v782
      %790 = vmatprep.subr.bf16.mxu0 0
      %791 = vmatpush1.bf16.msra.mxu0 0
      %792 = vmatprep.subr.bf16.mxu0 0
      %793 = vmatpush1.bf16.msra.mxu0 0
      %794 = vmatprep.subr.bf16.mxu0 0
      %795 = vmatpush1.bf16.msra.mxu0 0
      %796 = vmatprep.subr.bf16.mxu0 0
      %797 = vmatpush1.bf16.msra.mxu0 0
      %798 = vmatprep.subr.bf16.mxu0 0
      %799 = vmatpush1.bf16.msra.mxu0 0
      %800 = vmatprep.subr.bf16.mxu0 0
      %801 = vmatpush1.bf16.msra.mxu0 0
      %802 = vmatprep.subr.bf16.mxu0 0
      %803 = vmatpush1.bf16.msra.mxu0 0
      %804 = vmatprep.subr.bf16.mxu0 0
      %805 = vmatpush1.bf16.msra.mxu0 0
      %806 = vmatprep.subr.bf16.mxu0 0
      %807 = vmatpush1.bf16.msra.mxu0 0
      %808 = vmatprep.subr.bf16.mxu0 0
      %809 = vmatpush1.bf16.msra.mxu0 0
      %810 = vmatprep.subr.bf16.mxu0 0
      %811 = vmatpush1.bf16.msra.mxu0 0
      %812 = vmatprep.subr.bf16.mxu0 0
      %813 = vmatpush1.bf16.msra.mxu0 0
      %814 = vmatprep.subr.bf16.mxu0 0
      %815 = vmatpush1.bf16.msra.mxu0 0
      %816 = vmatprep.mubr.bf16.mxu0 0
      %817 = vmatmul.mubr.bf16.gmra.mrb[0].mxu0 %v775
      %v818 = vpop.f32.mrb[0].mxu0
      %v819 = vadd.f32 0.0, %v818
      %v820 = vpop.f32.mrb[0].mxu0
      %v821 = vpop.f32.mrb[0].mxu0
      %v822 = vadd.f32 0.0, %v821
      %v823 = vpop.f32.mrb[0].mxu0
      %824 = vmatprep.mubr.bf16.mxu0 0
      %825 = vmatmul.mubr.bf16.gmra.mrb[0].mxu0 %v778
      %v826 = vpop.f32.mrb[0].mxu0
      %v827 = vadd.f32 0.0, %v826
      %v828 = vpop.f32.mrb[0].mxu0
      %v829 = vpop.f32.mrb[0].mxu0
      %v830 = vadd.f32 0.0, %v829
      %v831 = vpop.f32.mrb[0].mxu0
      %832 = vdwg.mxu0
      %v833 = vlaneseq
      %v834 = vshrl.u32 %v833, 7
      %v835 = vsub.s32 0, %v834
      %v836 = vrot.slane %v734, %v835
      %v837 = vmul.f32 %v819, %v836
      %v838 = vmul.f32 %v822, %v836
      %v839 = vmul.f32 %v827, %v836
      %v840 = vmul.f32 %v830, %v836
      %vm841 = vcmask 261120
      %v843 = vsel %vm841, %v837, 0
      %v846 = vsel %vm841, %v838, 0
      %v849 = vsel %vm841, %v839, 0
      %v852 = vsel %vm841, %v840, 0
      %854 = vmatprep.subr.mxu0 0.0
      %855 = vmatpush1.msra.mxu0 %v421
      %856 = vmatprep.subr.mxu0 0.0
      %857 = vmatpush1.msra.mxu0 %v422
      %858 = vmatprep.subr.mxu0 0.0
      %859 = vmatpush1.msra.mxu0 %v423
      %860 = vmatprep.subr.mxu0 0.0
      %861 = vmatpush1.msra.mxu0 %v424
      %862 = vmatprep.subr.mxu0 0.0
      %863 = vmatpush1.msra.mxu0 0.0
      %864 = vmatprep.subr.mxu0 0.0
      %865 = vmatpush1.msra.mxu0 0.0
      %866 = vmatprep.subr.mxu0 0.0
      %867 = vmatpush1.msra.mxu0 0.0
      %868 = vmatprep.subr.mxu0 0.0
      %869 = vmatpush1.msra.mxu0 0.0
      %870 = vmatprep.subr.mxu0 0.0
      %871 = vmatpush1.msra.mxu0 0.0
      %872 = vmatprep.subr.mxu0 0.0
      %873 = vmatpush1.msra.mxu0 0.0
      %874 = vmatprep.subr.mxu0 0.0
      %875 = vmatpush1.msra.mxu0 0.0
      %876 = vmatprep.subr.mxu0 0.0
      %877 = vmatpush1.msra.mxu0 0.0
      %878 = vmatprep.subr.mxu0 0.0
      %879 = vmatpush1.msra.mxu0 0.0
      %880 = vmatprep.subr.mxu0 0.0
      %881 = vmatpush1.msra.mxu0 0.0
      %882 = vmatprep.subr.mxu0 0.0
      %883 = vmatpush1.msra.mxu0 0.0
      %884 = vmatprep.subr.mxu0 0.0
      %885 = vmatpush1.msra.mxu0 0.0
      %886 = vmatprep.subr.mxu0 0.0
      %887 = vmatpush1.msra.mxu0 0.0
      %888 = vmatprep.subr.mxu0 0.0
      %889 = vmatpush1.msra.mxu0 0.0
      %890 = vmatprep.subr.mxu0 0.0
      %891 = vmatpush1.msra.mxu0 0.0
      %892 = vmatprep.subr.mxu0 0.0
      %893 = vmatpush1.msra.mxu0 0.0
      %894 = vmatprep.subr.mxu0 0.0
      %895 = vmatpush1.msra.mxu0 0.0
      %896 = vmatprep.subr.mxu0 0.0
      %897 = vmatpush1.msra.mxu0 0.0
      %898 = vmatprep.subr.mxu0 0.0
      %899 = vmatpush1.msra.mxu0 0.0
      %900 = vmatprep.subr.mxu0 0.0
      %901 = vmatpush1.msra.mxu0 0.0
      %902 = vmatprep.subr.mxu0 0.0
      %903 = vmatpush1.msra.mxu0 0.0
      %904 = vmatprep.subr.mxu0 0.0
      %905 = vmatpush1.msra.mxu0 0.0
      %906 = vmatprep.subr.mxu0 0.0
      %907 = vmatpush1.msra.mxu0 0.0
      %908 = vmatprep.subr.mxu0 0.0
      %909 = vmatpush1.msra.mxu0 0.0
      %910 = vmatprep.subr.mxu0 0.0
      %911 = vmatpush1.msra.mxu0 0.0
      %912 = vmatprep.subr.mxu0 0.0
      %913 = vmatpush1.msra.mxu0 0.0
      %914 = vmatprep.subr.mxu0 0.0
      %915 = vmatpush1.msra.mxu0 0.0
      %916 = vmatprep.subr.mxu0 0.0
      %917 = vmatpush1.msra.mxu0 0.0
      %918 = vmatprep.mubr.f32.mxu0 0.0
      %919 = vmatmul.mubr.f32.gmra.mrb[0].mxu0 %v843
      %v920 = vpop.f32.mrb[0].mxu0
      %v921 = vadd.f32 0.0, %v920
      %v922 = vpop.f32.mrb[0].mxu0
      %923 = vmatprep.mubr.f32.mxu0 0.0
      %924 = vmatmul.mubr.f32.gmra.mrb[0].mxu0 %v846
      %v925 = vpop.f32.mrb[0].mxu0
      %v926 = vadd.f32 0.0, %v925
      %v927 = vpop.f32.mrb[0].mxu0
      %928 = vmatprep.mubr.f32.mxu0 0.0
      %929 = vmatmul.mubr.f32.gmra.mrb[0].mxu0 %v849
      %v930 = vpop.f32.mrb[0].mxu0
      %v931 = vadd.f32 0.0, %v930
      %v932 = vpop.f32.mrb[0].mxu0
      %933 = vmatprep.mubr.f32.mxu0 0.0
      %934 = vmatmul.mubr.f32.gmra.mrb[0].mxu0 %v852
      %v935 = vpop.f32.mrb[0].mxu0
      %v936 = vadd.f32 0.0, %v935
      %v937 = vpop.f32.mrb[0].mxu0
      %938 = vdwg.mxu0
      %939 = vst [vmem:[%s238] sm:$0xff] %v921
      %940 = vst [vmem:[%s238 + $0x8] sm:$0xff] %v926
      %941 = vst [vmem:[%s238 + $0x10] sm:$0xff] %v931
      %942 = vst [vmem:[%s238 + $0x18] sm:$0x1] %v936
      %p943 = scmp.lt.s32.totalorder %s16, 1
      %s944 = scalar_select %p943, %s16, 1
      %s945 = smul.addr %s944, 4
      %s946 = smul.addr %s945, 8
      %s947 = scalar_lea.vmem %s5, %s946
      // Predicated region
      $region41: #{odconv2d_forward.1} parent=39 // pred_check
        %p948 = pneg %p149
      $region42: #{odconv2d_forward.1} parent=39 // pred_check_branch
        %950 = sbr.rel (%p948) target = $region44
      $region43: #{odconv2d_forward.1} parent=39 // pred_region
        _
      $region44: #{odconv2d_forward.1} parent=39 // pred_fallthru
        _
    $region40: #{odconv2d_forward.1} parent=5 // pred_fallthru
      _
    %p951 = scmp.le.s32.totalorder 2, %s11
    // Predicated region
    $region45: #{odconv2d_forward.1} parent=5 // pred_check
      %p952 = pneg %p951
    $region46: #{odconv2d_forward.1} parent=5 // pred_check_branch
      %954 = sbr.rel (%p952) target = $region48
    $region47: #{odconv2d_forward.1} parent=5 // pred_region
      %s955 = ssub.s32 %s11, 2
      // Predicated region
      $region49: #{odconv2d_forward.1} parent=47 // pred_check
        %p956 = pneg %p155
      $region50: #{odconv2d_forward.1} parent=47 // pred_check_branch
        %958 = sbr.rel (%p956) target = $region52
      $region51: #{odconv2d_forward.1} parent=47 // pred_region
        %p959 = scmp.lt.s32.totalorder %s17, 1
        %s960 = scalar_select %p959, %s17, 1
        %s961 = smul.addr %s960, 4
        %s962 = smul.addr %s961, 8
        %s963 = scalar_lea.vmem %s5, %s962
      $region52: #{odconv2d_forward.1} parent=47 // pred_fallthru
        _
    $region48: #{odconv2d_forward.1} parent=5 // pred_fallthru
      _
  $region6: #{odconv2d_forward.1} parent=0 // loop_footer
    %s15 = sadd.s32 1, %s11
  $region7: #{odconv2d_forward.1} parent=0 // loop_footer_branch
    %10 = sbr.rel target = $region3
  $region8: #{odconv2d_forward.1} parent=0 // loop_exit
    _

</llo_original>
